<compile_context>
chip_gen: v6e
topology: v6e:2x2x1
jax: 0.10.0
libtpu: 0.0.40
codegen_flags: <defaults>
</compile_context>

<pallas_src>
import functools

import jax
import jax.numpy as jnp
from jax.experimental import pallas as pl
from jax.experimental.pallas import tpu as pltpu

LANES = 128
MAX_TILE_ROWS = 1024  # (1024, 128) f32 = 512 KiB per input per pipeline buffer


def _sided_bce_kernel(x_ref, y_ref, out_ref, *,
                      pos_weight, weight0, weight1, n_elems, tile_rows, lanes):
    i = pl.program_id(0)
    last = pl.num_programs(0) - 1

    x = x_ref[...].astype(jnp.float32)
    y = y_ref[...].astype(jnp.float32)

    # Stable BCE-with-logits term, same value as the reference algebra:
    #   max(-x,0) + log(exp(-max_val) + exp(-x-max_val)) == max(-x,0) + log(1+exp(-|x|))
    max_val = jnp.maximum(-x, 0.0)
    log_term = max_val + jnp.log(1.0 + jnp.exp(-jnp.abs(x)))
    log_weight = 1.0 + (pos_weight - 1.0) * y
    per_elem = x - x * y + log_weight * log_term

    # weight map: x_label = round(sigmoid(x)) == (x > 0)  (sign test, VPU-only)
    x_label = (x > 0.0).astype(jnp.float32)
    loss_map = x_label - y
    w = jnp.ones_like(x)
    w = jnp.where(loss_map == 1.0, jnp.float32(weight0), w)
    w = jnp.where(loss_map == -1.0, jnp.float32(weight1), w)

    wl = w * per_elem

    def write_partials(xm, ym, wlm, wm):
        sx = jnp.sum(xm, axis=0, keepdims=True)     # (1, lanes)
        sy = jnp.sum(ym, axis=0, keepdims=True)
        swl = jnp.sum(wlm, axis=0, keepdims=True)
        sw = jnp.sum(wm, axis=0, keepdims=True)
        out_ref[...] = jnp.concatenate([sx, sy, swl, sw], axis=0)[None]

    @pl.when(i < last)
    def _full_block():
        # All blocks except the last are fully in-bounds: no mask needed.
        write_partials(x, y, wl, w)

    @pl.when(i == last)
    def _ragged_block():
        # Mask out zero-padding / out-of-bounds garbage on the final block.
        row = jax.lax.broadcasted_iota(jnp.int32, x.shape, 0)
        col = jax.lax.broadcasted_iota(jnp.int32, x.shape, 1)
        gidx = (i * tile_rows + row) * lanes + col
        mask = gidx < n_elems
        zero = jnp.zeros_like(x)
        write_partials(jnp.where(mask, x, zero),
                       jnp.where(mask, y, zero),
                       jnp.where(mask, wl, zero),
                       jnp.where(mask, w, zero))


def sided_bce_loss_pallas(inputs, target, *, pos_weight, weight, area_weight):
    # None-branches of the module collapse to neutral constants.
    pw = 1.0 if pos_weight is None else float(pos_weight)
    w0, w1 = (1.0, 1.0) if weight is None else (float(weight[0]), float(weight[1]))

    x = inputs.reshape(-1)
    y = target.reshape(-1)
    n = x.shape[0]

    # Only pad (a copy) when n is not a multiple of 128; the common NCHW case
    # reshapes for free with no extra HBM pass.
    rem = n % LANES
    if rem:
        pad = LANES - rem
        x = jnp.pad(x, (0, pad))
        y = jnp.pad(y, (0, pad))
    rows = x.shape[0] // LANES
    x2d = x.reshape(rows, LANES)
    y2d = y.reshape(rows, LANES)

    # Big tiles, rounded to a sublane multiple; ragged last block is masked.
    tile_rows = min(MAX_TILE_ROWS, ((rows + 7) // 8) * 8)
    num_tiles = pl.cdiv(rows, tile_rows)

    kernel = functools.partial(
        _sided_bce_kernel,
        pos_weight=pw, weight0=w0, weight1=w1,
        n_elems=n, tile_rows=tile_rows, lanes=LANES,
    )

    partials = pl.pallas_call(
        kernel,
        out_shape=jax.ShapeDtypeStruct((num_tiles, 4, LANES), jnp.float32),
        grid_spec=pltpu.PrefetchScalarGridSpec(
            num_scalar_prefetch=0,
            grid=(num_tiles,),
            in_specs=[
                pl.BlockSpec((tile_rows, LANES), lambda i: (i, 0)),
                pl.BlockSpec((tile_rows, LANES), lambda i: (i, 0)),
            ],
            out_specs=pl.BlockSpec((1, 4, LANES), lambda i: (i, 0, 0)),
        ),
        # Per-tile partial sums are written to disjoint output blocks, so the
        # grid axis is truly parallel (sharded across both TCs on v7x).
        compiler_params=pltpu.CompilerParams(
            dimension_semantics=("parallel",)),
    )(x2d, y2d)

    # Tiny epilogue: combine partials into the final scalar.
    sums = jnp.sum(partials, axis=(0, 2))          # (4,)
    sum_x, sum_y, sum_wl, sum_w = sums[0], sums[1], sums[2], sums[3]
    area_loss = area_weight * sum_x / sum_y
    inv_n = 1.0 / jnp.float32(n)
    # mean(w * (per_elem + area_loss)) = sum(w*l)/N + area_loss * sum(w)/N
    return sum_wl * inv_n + area_loss * (sum_w * inv_n)


def sided_bce_loss_ref(inputs, target, *, pos_weight, weight, area_weight):
    x = inputs.reshape(-1).astype(jnp.float32)
    y = target.reshape(-1).astype(jnp.float32)
    max_val = jnp.maximum(-x, 0.0)
    area_loss = area_weight * x.sum() / y.sum()
    log_weight = 1.0 + (pos_weight - 1.0) * y
    loss = (x - x * y
            + log_weight * (max_val + jnp.log(jnp.exp(-max_val)
                                              + jnp.exp(-x - max_val)))
            + area_loss)
    # Sign test == round(sigmoid(x)) except where f32 sigmoid rounds to exactly
    # 0.5 for 0 < x <~ 1e-7 (measure-zero; matches the kernel's convention).
    x_label = (x > 0.0).astype(jnp.float32)
    loss_map = x_label - y
    w = jnp.ones_like(loss_map)
    w = jnp.where(loss_map == 1.0, weight[0], w)
    w = jnp.where(loss_map == -1.0, weight[1], w)
    return (w * loss).mean()


if __name__ == "__main__":
    # deterministic "parameters" (module __init__ args)
    pos_weight = 2.0
    weight = (1.5, 3.0)
    area_weight = 0.1

    key = jax.random.PRNGKey(0)
    k1, k2 = jax.random.split(key)
    inputs = jax.random.normal(k1, (2, 4, 16, 16), dtype=jnp.float32)
    target = (jax.random.uniform(k2, (2, 4, 16, 16)) > 0.5).astype(jnp.float32)

    out = sided_bce_loss_pallas(inputs, target, pos_weight=pos_weight,
                                weight=weight, area_weight=area_weight)
    out = jax.block_until_ready(out)

    ref = sided_bce_loss_ref(inputs, target, pos_weight=pos_weight,
                             weight=weight, area_weight=area_weight)
    assert jnp.allclose(out, ref, rtol=1e-4, atol=1e-5), (out, ref)
    print("KERNEL_OK")
</pallas_src>

<mosaic_0001>
module attributes {stable_mosaic.version = 11 : i64} {
  func.func @_sided_bce_kernel(%arg0: i32, %arg1: memref<16x128xf32, #tpu.memory_space<vmem>>, %arg2: memref<16x128xf32, #tpu.memory_space<vmem>>, %arg3: memref<1x4x128xf32, #tpu.memory_space<vmem>>) attributes {dimension_semantics = [#tpu.dimension_semantics<parallel>], iteration_bounds = array<i64: 1>, scalar_prefetch = 0 : i64, scratch_operands = 0 : i64, tpu.core_type = #tpu.core_type<tc>, window_params = [{transform_indices = @transform_0, window_bounds = array<i64: 16, 128>}, {transform_indices = @transform_1, window_bounds = array<i64: 16, 128>}, {transform_indices = @transform_2, window_bounds = array<i64: 1, 4, 128>}]} {
    %c0 = arith.constant 0 : index
    %c0_0 = arith.constant 0 : index
    %0 = vector.load %arg1[%c0, %c0_0] : memref<16x128xf32, #tpu.memory_space<vmem>>, vector<16x128xf32>
    %c0_1 = arith.constant 0 : index
    %c0_2 = arith.constant 0 : index
    %1 = vector.load %arg2[%c0_1, %c0_2] : memref<16x128xf32, #tpu.memory_space<vmem>>, vector<16x128xf32>
    %cst = arith.constant 0.000000e+00 : f32
    %2 = vector.broadcast %cst : f32 to vector<16x128xf32>
    %3 = arith.subf %2, %0 : vector<16x128xf32>
    %cst_3 = arith.constant 0.000000e+00 : f32
    %4 = vector.broadcast %cst_3 : f32 to vector<16x128xf32>
    %5 = arith.maximumf %3, %4 : vector<16x128xf32>
    %6 = math.absf %0 : vector<16x128xf32>
    %cst_4 = arith.constant 0.000000e+00 : f32
    %7 = vector.broadcast %cst_4 : f32 to vector<16x128xf32>
    %8 = arith.subf %7, %6 : vector<16x128xf32>
    %9 = math.exp %8 : vector<16x128xf32>
    %cst_5 = arith.constant 1.000000e+00 : f32
    %10 = vector.broadcast %cst_5 : f32 to vector<16x128xf32>
    %11 = arith.addf %10, %9 : vector<16x128xf32>
    %12 = math.log %11 : vector<16x128xf32>
    %13 = arith.addf %5, %12 : vector<16x128xf32>
    %cst_6 = arith.constant 1.000000e+00 : f32
    %14 = vector.broadcast %cst_6 : f32 to vector<16x128xf32>
    %15 = arith.mulf %14, %1 : vector<16x128xf32>
    %cst_7 = arith.constant 1.000000e+00 : f32
    %16 = vector.broadcast %cst_7 : f32 to vector<16x128xf32>
    %17 = arith.addf %16, %15 : vector<16x128xf32>
    %18 = arith.mulf %0, %1 : vector<16x128xf32>
    %19 = arith.subf %0, %18 : vector<16x128xf32>
    %20 = arith.mulf %17, %13 : vector<16x128xf32>
    %21 = arith.addf %19, %20 : vector<16x128xf32>
    %cst_8 = arith.constant 0.000000e+00 : f32
    %22 = vector.broadcast %cst_8 : f32 to vector<16x128xf32>
    %23 = arith.cmpf ogt, %0, %22 : vector<16x128xf32>
    %24 = arith.extui %23 : vector<16x128xi1> to vector<16x128xi32>
    %25 = arith.sitofp %24 : vector<16x128xi32> to vector<16x128xf32>
    %26 = arith.subf %25, %1 : vector<16x128xf32>
    %cst_9 = arith.constant 1.000000e+00 : f32
    %27 = vector.broadcast %cst_9 : f32 to vector<16x128xf32>
    %cst_10 = arith.constant 1.000000e+00 : f32
    %28 = vector.broadcast %cst_10 : f32 to vector<16x128xf32>
    %29 = arith.cmpf oeq, %26, %28 : vector<16x128xf32>
    %cst_11 = arith.constant 1.500000e+00 : f32
    %30 = vector.broadcast %cst_11 : f32 to vector<16x128xf32>
    %31 = arith.select %29, %30, %27 : vector<16x128xi1>, vector<16x128xf32>
    %cst_12 = arith.constant -1.000000e+00 : f32
    %32 = vector.broadcast %cst_12 : f32 to vector<16x128xf32>
    %33 = arith.cmpf oeq, %26, %32 : vector<16x128xf32>
    %cst_13 = arith.constant 3.000000e+00 : f32
    %34 = vector.broadcast %cst_13 : f32 to vector<16x128xf32>
    %35 = arith.select %33, %34, %31 : vector<16x128xi1>, vector<16x128xf32>
    %36 = arith.mulf %35, %21 : vector<16x128xf32>
    %c0_i32 = arith.constant 0 : i32
    %37 = arith.cmpi slt, %arg0, %c0_i32 : i32
    %38 = arith.extui %37 : i1 to i32
    %c0_i32_14 = arith.constant 0 : i32
    %39 = arith.cmpi ne, %38, %c0_i32_14 : i32
    scf.if %39 {
      %cst_17 = arith.constant dense<0.000000e+00> : vector<128xf32>
      %43 = vector.multi_reduction <add>, %0, %cst_17 [0] : vector<16x128xf32> to vector<128xf32>
      %44 = vector.shape_cast %43 : vector<128xf32> to vector<1x128xf32>
      %cst_18 = arith.constant dense<0.000000e+00> : vector<128xf32>
      %45 = vector.multi_reduction <add>, %1, %cst_18 [0] : vector<16x128xf32> to vector<128xf32>
      %46 = vector.shape_cast %45 : vector<128xf32> to vector<1x128xf32>
      %cst_19 = arith.constant dense<0.000000e+00> : vector<128xf32>
      %47 = vector.multi_reduction <add>, %36, %cst_19 [0] : vector<16x128xf32> to vector<128xf32>
      %48 = vector.shape_cast %47 : vector<128xf32> to vector<1x128xf32>
      %cst_20 = arith.constant dense<0.000000e+00> : vector<128xf32>
      %49 = vector.multi_reduction <add>, %35, %cst_20 [0] : vector<16x128xf32> to vector<128xf32>
      %50 = vector.shape_cast %49 : vector<128xf32> to vector<1x128xf32>
      %51 = tpu.concatenate %44, %46, %48, %50 in 0 : vector<1x128xf32>, vector<1x128xf32>, vector<1x128xf32>, vector<1x128xf32> -> vector<4x128xf32>
      %52 = vector.shape_cast %51 : vector<4x128xf32> to vector<1x4x128xf32>
      %c0_21 = arith.constant 0 : index
      %c0_22 = arith.constant 0 : index
      %c0_23 = arith.constant 0 : index
      %53 = vector.load %arg3[%c0_21, %c0_22, %c0_23] : memref<1x4x128xf32, #tpu.memory_space<vmem>>, vector<1x4x128xf32>
      tpu.vector_store %arg3[%c0_21, %c0_22, %c0_23], %52 {strides = array<i32>} : memref<1x4x128xf32, #tpu.memory_space<vmem>>, vector<1x4x128xf32>,
    } else {
    }
    %c0_i32_15 = arith.constant 0 : i32
    %40 = arith.cmpi eq, %arg0, %c0_i32_15 : i32
    %41 = arith.extui %40 : i1 to i32
    %c0_i32_16 = arith.constant 0 : i32
    %42 = arith.cmpi ne, %41, %c0_i32_16 : i32
    scf.if %42 {
      %43 = tpu.iota {dimensions = array<i32: 0>} : vector<16x128xi32>
      %44 = tpu.iota {dimensions = array<i32: 1>} : vector<16x128xi32>
      %c16_i32 = arith.constant 16 : i32
      %45 = arith.muli %arg0, %c16_i32 : i32
      %46 = vector.broadcast %45 : i32 to vector<16x128xi32>
      %47 = arith.addi %46, %43 : vector<16x128xi32>
      %c128_i32 = arith.constant 128 : i32
      %48 = vector.broadcast %c128_i32 : i32 to vector<16x128xi32>
      %49 = arith.muli %47, %48 : vector<16x128xi32>
      %50 = arith.addi %49, %44 : vector<16x128xi32>
      %c2048_i32 = arith.constant 2048 : i32
      %51 = vector.broadcast %c2048_i32 : i32 to vector<16x128xi32>
      %52 = arith.cmpi slt, %50, %51 : vector<16x128xi32>
      %cst_17 = arith.constant 0.000000e+00 : f32
      %53 = vector.broadcast %cst_17 : f32 to vector<16x128xf32>
      %54 = arith.select %52, %0, %53 : vector<16x128xi1>, vector<16x128xf32>
      %55 = arith.select %52, %1, %53 : vector<16x128xi1>, vector<16x128xf32>
      %56 = arith.select %52, %36, %53 : vector<16x128xi1>, vector<16x128xf32>
      %57 = arith.select %52, %35, %53 : vector<16x128xi1>, vector<16x128xf32>
      %cst_18 = arith.constant dense<0.000000e+00> : vector<128xf32>
      %58 = vector.multi_reduction <add>, %54, %cst_18 [0] : vector<16x128xf32> to vector<128xf32>
      %59 = vector.shape_cast %58 : vector<128xf32> to vector<1x128xf32>
      %cst_19 = arith.constant dense<0.000000e+00> : vector<128xf32>
      %60 = vector.multi_reduction <add>, %55, %cst_19 [0] : vector<16x128xf32> to vector<128xf32>
      %61 = vector.shape_cast %60 : vector<128xf32> to vector<1x128xf32>
      %cst_20 = arith.constant dense<0.000000e+00> : vector<128xf32>
      %62 = vector.multi_reduction <add>, %56, %cst_20 [0] : vector<16x128xf32> to vector<128xf32>
      %63 = vector.shape_cast %62 : vector<128xf32> to vector<1x128xf32>
      %cst_21 = arith.constant dense<0.000000e+00> : vector<128xf32>
      %64 = vector.multi_reduction <add>, %57, %cst_21 [0] : vector<16x128xf32> to vector<128xf32>
      %65 = vector.shape_cast %64 : vector<128xf32> to vector<1x128xf32>
      %66 = tpu.concatenate %59, %61, %63, %65 in 0 : vector<1x128xf32>, vector<1x128xf32>, vector<1x128xf32>, vector<1x128xf32> -> vector<4x128xf32>
      %67 = vector.shape_cast %66 : vector<4x128xf32> to vector<1x4x128xf32>
      %c0_22 = arith.constant 0 : index
      %c0_23 = arith.constant 0 : index
      %c0_24 = arith.constant 0 : index
      %68 = vector.load %arg3[%c0_22, %c0_23, %c0_24] : memref<1x4x128xf32, #tpu.memory_space<vmem>>, vector<1x4x128xf32>
      tpu.vector_store %arg3[%c0_22, %c0_23, %c0_24], %67 {strides = array<i32>} : memref<1x4x128xf32, #tpu.memory_space<vmem>>, vector<1x4x128xf32>,
    } else {
    }
    return
  }
  func.func @transform_0(%arg0: i32) -> (i32, i32) {
    %c0_i32 = arith.constant 0 : i32
    %c0_i32_0 = arith.constant 0 : i32
    return %arg0, %c0_i32 : i32, i32
  }
  func.func @transform_1(%arg0: i32) -> (i32, i32) {
    %c0_i32 = arith.constant 0 : i32
    %c0_i32_0 = arith.constant 0 : i32
    return %arg0, %c0_i32 : i32, i32
  }
  func.func @transform_2(%arg0: i32) -> (i32, i32, i32) {
    %c0_i32 = arith.constant 0 : i32
    %c0_i32_0 = arith.constant 0 : i32
    %c0_i32_1 = arith.constant 0 : i32
    return %arg0, %c0_i32, %c0_i32_0 : i32, i32, i32
  }
}

</mosaic_0001>

<llo_original>
// kernel: tpu_custom_call.1
$region0: #{tpu_custom_call.1}
  #allocation0 [shape = 'u32[]', space=smem, size = 0x4, offset = 0x4, fixed_abs, tag = 'smem constant byte address 0x4 - core index']
  #allocation1 [shape = 'u32[144,128]{1,0:T(1,128)}', space=vmem, size = 0x12000, scoped, tag = 'internal scratch']
  %s0 = inlined_call_operand.hbm [shape: f32[16,128], index: 0, kind: input, shape index: {}]
  %s1 = inlined_call_operand.hbm [shape: f32[16,128], index: 1, kind: input, shape index: {}]
  %s2 = inlined_call_operand.hbm [shape: f32[1,4,128], index: 2, kind: output, shape index: {}]
  %s3 = sld [smem:[#allocation0]]
  $region34: #{tpu_custom_call.1} parent=0
    _
  %s5 = ssub.s32 1, %s3
  %s6 = scalar_select 0, %s5, %s3
  $region1: #{tpu_custom_call.1} parent=0
    #allocation2 [shape = 'u8[8192]{0}', space=vmem, size = 0x2000, scoped, tag = 'input window, operand 0, single buffered']
    #allocation3 [shape = 's32[1]{0}', space=sflag, size = 0x4, scoped, tag = 'scoped memory for tpu_custom_call.1']
    #allocation4 [shape = 's32[1]{0}', space=sflag, size = 0x4, scoped, tag = 'scoped memory for tpu_custom_call.1']
    #allocation5 [shape = 'u8[8192]{0}', space=vmem, size = 0x2000, scoped, tag = 'input window, operand 1, single buffered']
    #allocation6 [shape = 's32[1]{0}', space=sflag, size = 0x4, scoped, tag = 'scoped memory for tpu_custom_call.1']
    #allocation7 [shape = 'u8[2048]{0}', space=vmem, size = 0x800, scoped, tag = 'output window, operand 0, single buffered']
    %7 = vsyncpa [#allocation3], 0
    %8 = vsyncpa [#allocation6], 0
    %9 = vsyncpa [#allocation4], 0
    // Predicated region
    $region2: #{tpu_custom_call.1} parent=1 // pred_check
      _
    $region3: #{tpu_custom_call.1} parent=1 // pred_check_branch
      %11 = sbr.rel (0) target = $region5
    $region4: #{tpu_custom_call.1} parent=1 // pred_region
      %s13 = ssub.s32 256, 256
      %14 = vsyncadd [#allocation3], %s13
      %s15 = sshll.u32 [#allocation2], 4
      %s16 = int_to_ptr.vmem [resolvable:$true] %s15
      %21 = dma.hbm_to_vmem [thread:$0]  %s0, 256, %s16, [#allocation3], 128, 128, 8
    $region5: #{tpu_custom_call.1} parent=1 // pred_fallthru
      _
    // Predicated region
    $region6: #{tpu_custom_call.1} parent=1 // pred_check
      _
    $region7: #{tpu_custom_call.1} parent=1 // pred_check_branch
      %23 = sbr.rel (0) target = $region9
    $region8: #{tpu_custom_call.1} parent=1 // pred_region
      %s25 = ssub.s32 256, 256
      %26 = vsyncadd [#allocation6], %s25
      %s27 = sshll.u32 [#allocation5], 4
      %s28 = int_to_ptr.vmem [resolvable:$true] %s27
      %33 = dma.hbm_to_vmem [thread:$0]  %s1, 256, %s28, [#allocation6], 128, 128, 8
    $region9: #{tpu_custom_call.1} parent=1 // pred_fallthru
      _
    // Predicated region
    $region10: #{tpu_custom_call.1} parent=1 // pred_check
      _
    $region11: #{tpu_custom_call.1} parent=1 // pred_check_branch
      %35 = sbr.rel (0) target = $region13
    $region12: #{tpu_custom_call.1} parent=1 // pred_region
      %36 = dma.done [#allocation3], 256
    $region13: #{tpu_custom_call.1} parent=1 // pred_fallthru
      _
    // Predicated region
    $region14: #{tpu_custom_call.1} parent=1 // pred_check
      _
    $region15: #{tpu_custom_call.1} parent=1 // pred_check_branch
      %38 = sbr.rel (0) target = $region17
    $region16: #{tpu_custom_call.1} parent=1 // pred_region
      %39 = dma.done [#allocation6], 256
    $region17: #{tpu_custom_call.1} parent=1 // pred_fallthru
      _
    %v40 = vld [vmem:[#allocation2] sm:$0xff]
    %v41 = vld [vmem:[#allocation2 + $0x8] sm:$0xff]
    %v42 = vld [vmem:[#allocation5] sm:$0xff]
    %v43 = vld [vmem:[#allocation5 + $0x8] sm:$0xff]
    %v44 = vsub.f32 0.0, %v40
    %v45 = vsub.f32 0.0, %v41
    %v46 = vmax.f32 %v44, 0.0
    %v47 = vmax.f32 %v45, 0.0
    %v48 = vand.u32 2147483647, %v40
    %v49 = vand.u32 2147483647, %v41
    %v50 = vsub.f32 0.0, %v48
    %v51 = vsub.f32 0.0, %v49
    %v52 = vmul.f32 %v50, 1.442695
    %v53 = vpow.pop %v52
    %v54 = vmul.f32 %v51, 1.442695
    %v55 = vpow.pop %v54
    %v56 = vadd.f32 %v53, 1.0
    %v57 = vadd.f32 %v55, 1.0
    %v58 = vlog2.pop %v56
    %v59 = vmul.f32 %v58, 0.6931472
    %v60 = vlog2.pop %v57
    %v61 = vmul.f32 %v60, 0.6931472
    %v62 = vadd.f32 %v46, %v59
    %v63 = vadd.f32 %v47, %v61
    %v64 = vadd.f32 %v42, 1.0
    %v65 = vadd.f32 %v43, 1.0
    %v66 = vmul.f32 %v40, %v42
    %v67 = vmul.f32 %v41, %v43
    %v68 = vsub.f32 %v40, %v66
    %v69 = vsub.f32 %v41, %v67
    %v70 = vmul.f32 %v64, %v62
    %v71 = vmul.f32 %v65, %v63
    %v72 = vadd.f32 %v68, %v70
    %v73 = vadd.f32 %v69, %v71
    %vm74 = vcmp.gt.f32.partialorder %v40, 0.0
    %vm75 = vcmp.gt.f32.partialorder %v41, 0.0
    %v76 = vsel %vm74, 1, 0
    %v77 = vsel %vm75, 1, 0
    %v78 = vcvt.s32.f32 %v76
    %v79 = vcvt.s32.f32 %v77
    %v80 = vsub.f32 %v78, %v42
    %v81 = vsub.f32 %v79, %v43
    %vm82 = vcmp.eq.f32.partialorder %v80, 1.0
    %vm83 = vcmp.eq.f32.partialorder %v81, 1.0
    %v84 = vsel %vm82, 1.5, 1.0
    %v85 = vsel %vm83, 1.5, 1.0
    %vm86 = vcmp.eq.f32.partialorder %v80, -1.0
    %vm87 = vcmp.eq.f32.partialorder %v81, -1.0
    %v88 = vsel %vm86, 3.0, %v84
    %v89 = vsel %vm87, 3.0, %v85
    %v90 = vmul.f32 %v88, %v72
    %v91 = vmul.f32 %v89, %v73
    %p92 = scmp.lt.s32.totalorder 0, 0
    // Predicated region
    $region18: #{tpu_custom_call.1} parent=1 // pred_check
      %p93 = pneg %p92
    $region19: #{tpu_custom_call.1} parent=1 // pred_check_branch
      %95 = sbr.rel (%p93) target = $region21
    $region20: #{tpu_custom_call.1} parent=1 // pred_region
      %v96 = vadd.f32 %v40, %v41
      %v97 = vrot.slane %v96, 4
      %v98 = vadd.f32 %v96, %v97
      %v99 = vrot.slane %v98, 2
      %v100 = vadd.f32 %v98, %v99
      %v101 = vrot.slane %v100, 1
      %v102 = vadd.f32 %v100, %v101
      %v103 = vadd.f32 %v42, %v43
      %v104 = vrot.slane %v103, 4
      %v105 = vadd.f32 %v103, %v104
      %v106 = vrot.slane %v105, 2
      %v107 = vadd.f32 %v105, %v106
      %v108 = vrot.slane %v107, 1
      %v109 = vadd.f32 %v107, %v108
      %v110 = vadd.f32 %v90, %v91
      %v111 = vrot.slane %v110, 4
      %v112 = vadd.f32 %v110, %v111
      %v113 = vrot.slane %v112, 2
      %v114 = vadd.f32 %v112, %v113
      %v115 = vrot.slane %v114, 1
      %v116 = vadd.f32 %v114, %v115
      %v117 = vadd.f32 %v88, %v89
      %v118 = vrot.slane %v117, 4
      %v119 = vadd.f32 %v117, %v118
      %v120 = vrot.slane %v119, 2
      %v121 = vadd.f32 %v119, %v120
      %v122 = vrot.slane %v121, 1
      %v123 = vadd.f32 %v121, %v122
      %vm124 = vcmask 1040384
      %v125 = vsel %vm124, %v102, %v109
      %vm126 = vcmask 1041408
      %v127 = vsel %vm126, %v125, %v116
      %vm128 = vcmask 1042432
      %v129 = vsel %vm128, %v127, %v123
      %130 = vst [vmem:[#allocation7] sm:$0xf] %v129
    $region21: #{tpu_custom_call.1} parent=1 // pred_fallthru
      _
    %p131 = scmp.eq.s32.totalorder 0, 0
    // Predicated region
    $region22: #{tpu_custom_call.1} parent=1 // pred_check
      %p132 = pneg %p131
    $region23: #{tpu_custom_call.1} parent=1 // pred_check_branch
      %134 = sbr.rel (%p132) target = $region25
    $region24: #{tpu_custom_call.1} parent=1 // pred_region
      %v135 = vlaneseq
      %v136 = vshrl.u32 %v135, 7
      %v137 = vadd.s32 %v136, 8
      %v138 = vlaneseq
      %v139 = vand.u32 %v138, 127
      %s140 = smul.u32 0, 16
      %v141 = vstv %s140
      %v142 = vadd.s32 %v141, %v136
      %v143 = vadd.s32 %v141, %v137
      %v144 = vmul.u32 %v142, 128
      %v145 = vmul.u32 %v143, 128
      %v146 = vadd.s32 %v144, %v139
      %v147 = vadd.s32 %v145, %v139
      %vm148 = vcmp.lt.s32.totalorder %v146, 2048
      %vm149 = vcmp.lt.s32.totalorder %v147, 2048
      %v150 = vsel %vm148, %v40, 0.0
      %v151 = vsel %vm149, %v41, 0.0
      %v152 = vsel %vm148, %v42, 0.0
      %v153 = vsel %vm149, %v43, 0.0
      %v154 = vsel %vm148, %v90, 0.0
      %v155 = vsel %vm149, %v91, 0.0
      %v156 = vsel %vm148, %v88, 0.0
      %v157 = vsel %vm149, %v89, 0.0
      %v158 = vadd.f32 %v150, %v151
      %v159 = vrot.slane %v158, 4
      %v160 = vadd.f32 %v158, %v159
      %v161 = vrot.slane %v160, 2
      %v162 = vadd.f32 %v160, %v161
      %v163 = vrot.slane %v162, 1
      %v164 = vadd.f32 %v162, %v163
      %v165 = vadd.f32 %v152, %v153
      %v166 = vrot.slane %v165, 4
      %v167 = vadd.f32 %v165, %v166
      %v168 = vrot.slane %v167, 2
      %v169 = vadd.f32 %v167, %v168
      %v170 = vrot.slane %v169, 1
      %v171 = vadd.f32 %v169, %v170
      %v172 = vadd.f32 %v154, %v155
      %v173 = vrot.slane %v172, 4
      %v174 = vadd.f32 %v172, %v173
      %v175 = vrot.slane %v174, 2
      %v176 = vadd.f32 %v174, %v175
      %v177 = vrot.slane %v176, 1
      %v178 = vadd.f32 %v176, %v177
      %v179 = vadd.f32 %v156, %v157
      %v180 = vrot.slane %v179, 4
      %v181 = vadd.f32 %v179, %v180
      %v182 = vrot.slane %v181, 2
      %v183 = vadd.f32 %v181, %v182
      %v184 = vrot.slane %v183, 1
      %v185 = vadd.f32 %v183, %v184
      %vm186 = vcmask 1040384
      %v187 = vsel %vm186, %v164, %v171
      %vm188 = vcmask 1041408
      %v189 = vsel %vm188, %v187, %v178
      %vm190 = vcmask 1042432
      %v191 = vsel %vm190, %v189, %v185
      %192 = vst [vmem:[#allocation7] sm:$0xf] %v191
    $region25: #{tpu_custom_call.1} parent=1 // pred_fallthru
      _
    // Predicated region
    $region26: #{tpu_custom_call.1} parent=1 // pred_check
      _
    $region27: #{tpu_custom_call.1} parent=1 // pred_check_branch
      %194 = sbr.rel (0) target = $region29
    $region28: #{tpu_custom_call.1} parent=1 // pred_region
      %s196 = ssub.s32 64, 64
      %197 = vsyncadd [#allocation4], %s196
      %s199 = sshll.u32 [#allocation7], 4
      %s200 = int_to_ptr.vmem [resolvable:$true] %s199
      %202 = dma.vmem_to_hbm [thread:$0]  %s200, 64, %s2, [#allocation4]
    $region29: #{tpu_custom_call.1} parent=1 // pred_fallthru
      _
    // Predicated region
    $region30: #{tpu_custom_call.1} parent=1 // pred_check
      _
    $region31: #{tpu_custom_call.1} parent=1 // pred_check_branch
      %204 = sbr.rel (0) target = $region33
    $region32: #{tpu_custom_call.1} parent=1 // pred_region
      %205 = dma.done [#allocation4], 64
    $region33: #{tpu_custom_call.1} parent=1 // pred_fallthru
      _
    %206 = vsyncpa [#allocation3], 1
    %207 = vsyncpa [#allocation6], 1
    %208 = vsyncpa [#allocation4], 1

</llo_original>
